<compile_context>
chip_gen: v7x
topology: tpu7x:2x2x1
jax: 0.10.0
libtpu: 0.0.40
codegen_flags: <defaults>
</compile_context>

<pallas_src>
import functools

import jax
import jax.numpy as jnp
from jax.experimental import pallas as pl
from jax.experimental.pallas import tpu as pltpu

_LANE = 128
_SUBLANE = 8


def _round_up(x, m):
    return (x + m - 1) // m * m


def _cdiv(a, b):
    return -(-a // b)


def _critic_kernel(state_ref, act_ref, w_ref, b_ref, o_ref, xin_ref, *, sd1, ad):
    """state_ref: (TB, state_dim+1) raw [features | alloc];  act_ref: (TB, action_dim).
    w_ref: (6, pad, pad) stack [W1, W2, W3, W4x, W4e(rows shifted by state_dim), Wheads].
    b_ref: (8, pad) f32 rows [b1, b2, b3, b4, bheads, 0, 0, 0].
    o_ref: (TB, pad) f32; column 0 = q1, column 1 = q2, rest zeros.
    xin_ref: (TB, pad) VMEM scratch holding the padded 128-lane input slab."""
    cdt = w_ref.dtype                      # MXU operand dtype (f32, or bf16 opt-in)
    tb, pad = xin_ref.shape

    # Assemble [features | alloc | action | 0...0] in VMEM (no HBM staging slab).
    xin_ref[:, 0:sd1] = state_ref[...]
    xin_ref[:, sd1:sd1 + ad] = act_ref[...]
    xin_ref[:, sd1 + ad:] = jnp.zeros((tb, pad - sd1 - ad), xin_ref.dtype)
    x = xin_ref[...]

    h = jnp.dot(x, w_ref[0], preferred_element_type=jnp.float32)
    h = jnp.maximum(h + b_ref[0:1, :], 0.0)

    h = jnp.dot(h.astype(cdt), w_ref[1], preferred_element_type=jnp.float32)
    h = jnp.maximum(h + b_ref[1:2, :], 0.0)

    h = jnp.dot(h.astype(cdt), w_ref[2], preferred_element_type=jnp.float32)
    h = jnp.maximum(h + b_ref[2:3, :], 0.0)

    # concat([x3, alloc, action]) @ W4  ==  x3 @ W4x + xin @ W4e_shifted
    pre4 = (jnp.dot(h.astype(cdt), w_ref[3], preferred_element_type=jnp.float32)
            + jnp.dot(x, w_ref[4], preferred_element_type=jnp.float32)
            + b_ref[3:4, :])
    h4 = jnp.maximum(pre4, 0.0)

    q = jnp.dot(h4.astype(cdt), w_ref[5], preferred_element_type=jnp.float32) + b_ref[4:5, :]
    o_ref[...] = q.astype(o_ref.dtype)


def init_critic_params(key, state_dim, action_dim, hidden):
    """PyTorch-Linear-style init (uniform +/- 1/sqrt(fan_in)); weights stored (in, out)."""
    h0, h1, h2 = hidden
    ks = jax.random.split(key, 12)

    def linear(kw, kb, fan_in, fan_out):
        bound = 1.0 / jnp.sqrt(jnp.float32(fan_in))
        w = jax.random.uniform(kw, (fan_in, fan_out), jnp.float32, -bound, bound)
        b = jax.random.uniform(kb, (fan_out,), jnp.float32, -bound, bound)
        return w, b

    w1, b1 = linear(ks[0], ks[1], state_dim, h0)
    w2, b2 = linear(ks[2], ks[3], h0, h1)
    w3, b3 = linear(ks[4], ks[5], h1, h2)
    w4, b4 = linear(ks[6], ks[7], h2 + 1 + action_dim, h2)
    wq1, bq1 = linear(ks[8], ks[9], h2, 1)
    wq2, bq2 = linear(ks[10], ks[11], h2, 1)
    return dict(w1=w1, b1=b1, w2=w2, b2=b2, w3=w3, b3=b3, w4=w4, b4=b4,
                wq1=wq1, bq1=bq1, wq2=wq2, bq2=bq2)


def pack_critic_params(params, state_dim, action_dim, *, dtype=jnp.float32):
    """One-time packing of the 12 parameter tensors into 2 padded buffers.

    dtype=jnp.bfloat16 halves weight + streamed-activation DMA bytes (recommended
    on v6e/v7x, where the MXU is bf16-native); accumulation / bias / ReLU stay f32.
    Keep the f32 default on v5e or when exact f32 matching is required."""
    h0 = params["w1"].shape[1]
    h1 = params["w2"].shape[1]
    h2 = params["w3"].shape[1]
    in_width = state_dim + 1 + action_dim
    pad = _round_up(max(in_width, h0, h1, h2, _LANE), _LANE)
    # Feature / alloc / action columns share one 128-lane slab; must not overlap pad.
    assert in_width <= pad, "state_dim + 1 + action_dim must fit in one padded slab"

    def padw(w, row_offset=0):
        out = jnp.zeros((pad, pad), jnp.float32)
        return out.at[row_offset:row_offset + w.shape[0], :w.shape[1]].set(
            w.astype(jnp.float32))

    w4 = params["w4"]
    w4x = w4[:h2, :]                 # x-part of the concat input
    w4e = w4[h2:, :]                 # [alloc, action] part -> shifted to slab columns
    wheads = jnp.concatenate([params["wq1"], params["wq2"]], axis=1)     # (h2, 2)

    wstack = jnp.stack([padw(params["w1"]), padw(params["w2"]), padw(params["w3"]),
                        padw(w4x), padw(w4e, row_offset=state_dim), padw(wheads)])
    wstack = wstack.astype(dtype)                                        # (6, pad, pad)

    bpack = jnp.zeros((_SUBLANE, pad), jnp.float32)   # biases / ReLU stay f32 always
    bpack = bpack.at[0, :h0].set(params["b1"])
    bpack = bpack.at[1, :h1].set(params["b2"])
    bpack = bpack.at[2, :h2].set(params["b3"])
    bpack = bpack.at[3, :h2].set(params["b4"])
    bpack = bpack.at[4, 0].set(params["bq1"][0])
    bpack = bpack.at[4, 1].set(params["bq2"][0])

    return {"wstack": wstack, "bpack": bpack, "pad": int(pad)}


def critic_alloc_forward(state, action, packed, *, tile_b=1024):
    """state: (..., state_dim+1) (last column = allocation); action: (..., action_dim).
    Returns (q1, q2), each (..., 1) float32."""
    pad = packed["pad"]
    wstack, bpack = packed["wstack"], packed["bpack"]
    in_dtype = wstack.dtype            # stream activations in the MXU operand dtype

    lead = state.shape[:-1]
    state2 = state.reshape(-1, state.shape[-1]).astype(in_dtype)
    action2 = action.reshape(-1, action.shape[-1]).astype(in_dtype)

    b = state2.shape[0]
    sd1 = state2.shape[1]              # state_dim + 1 (features + alloc column)
    ad = action2.shape[1]
    assert sd1 + ad <= pad

    # Tile selection: bound zero-row padding waste to <8 rows and keep >=2 grid
    # steps for large batches so the "parallel" axis can feed both v7x TensorCores.
    b_min = _round_up(max(b, 1), _SUBLANE)
    nb = _cdiv(b_min, tile_b)
    if nb == 1 and b_min >= 256:       # split only when each tile stays >=128 rows
        nb = 2
    tb = _round_up(_cdiv(b_min, nb), _SUBLANE)
    nb = _cdiv(b_min, tb)
    b_pad = nb * tb

    if b_pad != b:                     # pad batch rows only (cheap vs. the old slab)
        state2 = jnp.pad(state2, ((0, b_pad - b), (0, 0)))
        action2 = jnp.pad(action2, ((0, b_pad - b), (0, 0)))

    kernel = functools.partial(_critic_kernel, sd1=sd1, ad=ad)

    out = pl.pallas_call(
        kernel,
        out_shape=jax.ShapeDtypeStruct((b_pad, pad), jnp.float32),
        grid=(nb,),
        in_specs=[
            pl.BlockSpec((tb, sd1), lambda i: (i, 0)),        # streamed raw state tile
            pl.BlockSpec((tb, ad), lambda i: (i, 0)),         # streamed raw action tile
            pl.BlockSpec(wstack.shape, lambda i: (0, 0, 0)),  # VMEM-resident weights
            pl.BlockSpec(bpack.shape, lambda i: (0, 0)),      # VMEM-resident biases
        ],
        out_specs=pl.BlockSpec((tb, pad), lambda i: (i, 0)),  # lane-dense output slab
        scratch_shapes=[pltpu.VMEM((tb, pad), in_dtype)],     # padded activation slab
        compiler_params=pltpu.CompilerParams(
            dimension_semantics=("parallel",),                # megacore on v7x
        ),
    )(state2, action2, wstack, bpack)

    q1 = out[:b, 0:1].reshape(*lead, 1)
    q2 = out[:b, 1:2].reshape(*lead, 1)
    return q1, q2


def critic_reference(state, action, params):
    features = state[..., :-1]
    alloc = state[..., -1:]
    x = jnp.maximum(features @ params["w1"] + params["b1"], 0.0)
    x = jnp.maximum(x @ params["w2"] + params["b2"], 0.0)
    x = jnp.maximum(x @ params["w3"] + params["b3"], 0.0)
    xa = jnp.concatenate([x, alloc, action], axis=-1)
    h = jnp.maximum(xa @ params["w4"] + params["b4"], 0.0)
    q1 = h @ params["wq1"] + params["bq1"]
    q2 = h @ params["wq2"] + params["bq2"]
    return q1, q2


if __name__ == "__main__":
    # Small shapes consistent with the module's forward pass.
    batch = 2
    state_dim = 16                 # feature count; full state vector has state_dim + 1 columns
    action_dim = 8
    hidden = (32, 32, 32)

    key = jax.random.PRNGKey(0)
    k_s, k_a, k_p, k_s3, k_a3 = jax.random.split(key, 5)

    params = init_critic_params(k_p, state_dim, action_dim, hidden)
    packed = pack_critic_params(params, state_dim, action_dim)   # f32 -> exact vs reference

    # 2-D case (state.dim() == 2)
    state = jax.random.normal(k_s, (batch, state_dim + 1), jnp.float32)
    action = jax.random.normal(k_a, (batch, action_dim), jnp.float32)
    q1, q2 = critic_alloc_forward(state, action, packed)
    q1, q2 = jax.block_until_ready((q1, q2))
    r1, r2 = critic_reference(state, action, params)
    assert q1.shape == (batch, 1) and q2.shape == (batch, 1)
    assert jnp.allclose(q1, r1, atol=1e-5, rtol=1e-5), "q1 mismatch vs reference (2-D)"
    assert jnp.allclose(q2, r2, atol=1e-5, rtol=1e-5), "q2 mismatch vs reference (2-D)"

    # 3-D case (state.dim() == 3) — exercises leading-dim flattening + batch padding.
    state3 = jax.random.normal(k_s3, (batch, 5, state_dim + 1), jnp.float32)
    action3 = jax.random.normal(k_a3, (batch, 5, action_dim), jnp.float32)
    q1, q2 = critic_alloc_forward(state3, action3, packed)
    q1, q2 = jax.block_until_ready((q1, q2))
    r1, r2 = critic_reference(state3, action3, params)
    assert q1.shape == (batch, 5, 1) and q2.shape == (batch, 5, 1)
    assert jnp.allclose(q1, r1, atol=1e-5, rtol=1e-5), "q1 mismatch vs reference (3-D)"
    assert jnp.allclose(q2, r2, atol=1e-5, rtol=1e-5), "q2 mismatch vs reference (3-D)"

    print("KERNEL_OK")
</pallas_src>

<mosaic_0001>
module attributes {stable_mosaic.version = 11 : i64} {
  func.func @_critic_kernel(%arg0: i32, %arg1: memref<8x17xf32, #tpu.memory_space<vmem>>, %arg2: memref<8x8xf32, #tpu.memory_space<vmem>>, %arg3: memref<6x128x128xf32, #tpu.memory_space<vmem>>, %arg4: memref<8x128xf32, #tpu.memory_space<vmem>>, %arg5: memref<8x128xf32, #tpu.memory_space<vmem>>, %arg6: memref<8x128xf32, #tpu.memory_space<vmem>>) attributes {dimension_semantics = [#tpu.dimension_semantics<parallel>], iteration_bounds = array<i64: 1>, scalar_prefetch = 0 : i64, scratch_operands = 1 : i64, tpu.core_type = #tpu.core_type<tc>, window_params = [{transform_indices = @transform_0, window_bounds = array<i64: 8, 17>}, {transform_indices = @transform_1, window_bounds = array<i64: 8, 8>}, {pipeline_mode = #tpu.pipeline_mode<synchronous>, transform_indices = @transform_2, window_bounds = array<i64: 6, 128, 128>}, {pipeline_mode = #tpu.pipeline_mode<synchronous>, transform_indices = @transform_3, window_bounds = array<i64: 8, 128>}, {transform_indices = @transform_4, window_bounds = array<i64: 8, 128>}]} {
    %c0 = arith.constant 0 : index
    %c0_0 = arith.constant 0 : index
    %0 = vector.load %arg1[%c0, %c0_0] : memref<8x17xf32, #tpu.memory_space<vmem>>, vector<8x17xf32>
    %c0_1 = arith.constant 0 : index
    %c0_2 = arith.constant 0 : index
    %1 = vector.load %arg6[%c0_1, %c0_2] : memref<8x128xf32, #tpu.memory_space<vmem>>, vector<8x17xf32>
    tpu.vector_store %arg6[%c0_1, %c0_2], %0 {strides = array<i32>} : memref<8x128xf32, #tpu.memory_space<vmem>>, vector<8x17xf32>,
    %c0_3 = arith.constant 0 : index
    %c0_4 = arith.constant 0 : index
    %2 = vector.load %arg2[%c0_3, %c0_4] : memref<8x8xf32, #tpu.memory_space<vmem>>, vector<8x8xf32>
    %c0_5 = arith.constant 0 : index
    %c17 = arith.constant 17 : index
    %3 = vector.load %arg6[%c0_5, %c17] : memref<8x128xf32, #tpu.memory_space<vmem>>, vector<8x8xf32>
    tpu.vector_store %arg6[%c0_5, %c17], %2 {strides = array<i32>} : memref<8x128xf32, #tpu.memory_space<vmem>>, vector<8x8xf32>,
    %cst = arith.constant 0.000000e+00 : f32
    %4 = vector.broadcast %cst : f32 to vector<8x103xf32>
    %c0_6 = arith.constant 0 : index
    %c25 = arith.constant 25 : index
    %5 = vector.load %arg6[%c0_6, %c25] : memref<8x128xf32, #tpu.memory_space<vmem>>, vector<8x103xf32>
    tpu.vector_store %arg6[%c0_6, %c25], %4 {strides = array<i32>} : memref<8x128xf32, #tpu.memory_space<vmem>>, vector<8x103xf32>,
    %c0_7 = arith.constant 0 : index
    %c0_8 = arith.constant 0 : index
    %6 = vector.load %arg6[%c0_7, %c0_8] : memref<8x128xf32, #tpu.memory_space<vmem>>, vector<8x128xf32>
    %c0_9 = arith.constant 0 : index
    %c0_10 = arith.constant 0 : index
    %c0_11 = arith.constant 0 : index
    %7 = vector.load %arg3[%c0_9, %c0_10, %c0_11] : memref<6x128x128xf32, #tpu.memory_space<vmem>>, vector<1x128x128xf32>
    %8 = vector.shape_cast %7 : vector<1x128x128xf32> to vector<128x128xf32>
    %cst_12 = arith.constant dense<0.000000e+00> : vector<8x128xf32>
    %9 = tpu.matmul %6, %8, %cst_12 {dimension_numbers = #tpu.dot_dimension_numbers<[1], [0], [0], [1], [0, 0, 1, 1], [], []>} : vector<8x128xf32>, vector<128x128xf32>, vector<8x128xf32> -> vector<8x128xf32>
    %c0_13 = arith.constant 0 : index
    %c0_14 = arith.constant 0 : index
    %10 = vector.load %arg4[%c0_13, %c0_14] : memref<8x128xf32, #tpu.memory_space<vmem>>, vector<1x128xf32>
    %11 = vector.broadcast %10 : vector<1x128xf32> to vector<8x128xf32>
    %12 = arith.addf %9, %11 : vector<8x128xf32>
    %cst_15 = arith.constant 0.000000e+00 : f32
    %13 = vector.broadcast %cst_15 : f32 to vector<8x128xf32>
    %14 = arith.maximumf %12, %13 : vector<8x128xf32>
    %c1 = arith.constant 1 : index
    %c0_16 = arith.constant 0 : index
    %c0_17 = arith.constant 0 : index
    %15 = vector.load %arg3[%c1, %c0_16, %c0_17] : memref<6x128x128xf32, #tpu.memory_space<vmem>>, vector<1x128x128xf32>
    %16 = vector.shape_cast %15 : vector<1x128x128xf32> to vector<128x128xf32>
    %cst_18 = arith.constant dense<0.000000e+00> : vector<8x128xf32>
    %17 = tpu.matmul %14, %16, %cst_18 {dimension_numbers = #tpu.dot_dimension_numbers<[1], [0], [0], [1], [0, 0, 1, 1], [], []>} : vector<8x128xf32>, vector<128x128xf32>, vector<8x128xf32> -> vector<8x128xf32>
    %c1_19 = arith.constant 1 : index
    %c0_20 = arith.constant 0 : index
    %18 = vector.load %arg4[%c1_19, %c0_20] : memref<8x128xf32, #tpu.memory_space<vmem>>, vector<1x128xf32>
    %19 = vector.broadcast %18 : vector<1x128xf32> to vector<8x128xf32>
    %20 = arith.addf %17, %19 : vector<8x128xf32>
    %cst_21 = arith.constant 0.000000e+00 : f32
    %21 = vector.broadcast %cst_21 : f32 to vector<8x128xf32>
    %22 = arith.maximumf %20, %21 : vector<8x128xf32>
    %c2 = arith.constant 2 : index
    %c0_22 = arith.constant 0 : index
    %c0_23 = arith.constant 0 : index
    %23 = vector.load %arg3[%c2, %c0_22, %c0_23] : memref<6x128x128xf32, #tpu.memory_space<vmem>>, vector<1x128x128xf32>
    %24 = vector.shape_cast %23 : vector<1x128x128xf32> to vector<128x128xf32>
    %cst_24 = arith.constant dense<0.000000e+00> : vector<8x128xf32>
    %25 = tpu.matmul %22, %24, %cst_24 {dimension_numbers = #tpu.dot_dimension_numbers<[1], [0], [0], [1], [0, 0, 1, 1], [], []>} : vector<8x128xf32>, vector<128x128xf32>, vector<8x128xf32> -> vector<8x128xf32>
    %c2_25 = arith.constant 2 : index
    %c0_26 = arith.constant 0 : index
    %26 = vector.load %arg4[%c2_25, %c0_26] : memref<8x128xf32, #tpu.memory_space<vmem>>, vector<1x128xf32>
    %27 = vector.broadcast %26 : vector<1x128xf32> to vector<8x128xf32>
    %28 = arith.addf %25, %27 : vector<8x128xf32>
    %cst_27 = arith.constant 0.000000e+00 : f32
    %29 = vector.broadcast %cst_27 : f32 to vector<8x128xf32>
    %30 = arith.maximumf %28, %29 : vector<8x128xf32>
    %c3 = arith.constant 3 : index
    %c0_28 = arith.constant 0 : index
    %c0_29 = arith.constant 0 : index
    %31 = vector.load %arg3[%c3, %c0_28, %c0_29] : memref<6x128x128xf32, #tpu.memory_space<vmem>>, vector<1x128x128xf32>
    %32 = vector.shape_cast %31 : vector<1x128x128xf32> to vector<128x128xf32>
    %cst_30 = arith.constant dense<0.000000e+00> : vector<8x128xf32>
    %33 = tpu.matmul %30, %32, %cst_30 {dimension_numbers = #tpu.dot_dimension_numbers<[1], [0], [0], [1], [0, 0, 1, 1], [], []>} : vector<8x128xf32>, vector<128x128xf32>, vector<8x128xf32> -> vector<8x128xf32>
    %c4 = arith.constant 4 : index
    %c0_31 = arith.constant 0 : index
    %c0_32 = arith.constant 0 : index
    %34 = vector.load %arg3[%c4, %c0_31, %c0_32] : memref<6x128x128xf32, #tpu.memory_space<vmem>>, vector<1x128x128xf32>
    %35 = vector.shape_cast %34 : vector<1x128x128xf32> to vector<128x128xf32>
    %cst_33 = arith.constant dense<0.000000e+00> : vector<8x128xf32>
    %36 = tpu.matmul %6, %35, %cst_33 {dimension_numbers = #tpu.dot_dimension_numbers<[1], [0], [0], [1], [0, 0, 1, 1], [], []>} : vector<8x128xf32>, vector<128x128xf32>, vector<8x128xf32> -> vector<8x128xf32>
    %37 = arith.addf %33, %36 : vector<8x128xf32>
    %c3_34 = arith.constant 3 : index
    %c0_35 = arith.constant 0 : index
    %38 = vector.load %arg4[%c3_34, %c0_35] : memref<8x128xf32, #tpu.memory_space<vmem>>, vector<1x128xf32>
    %39 = vector.broadcast %38 : vector<1x128xf32> to vector<8x128xf32>
    %40 = arith.addf %37, %39 : vector<8x128xf32>
    %cst_36 = arith.constant 0.000000e+00 : f32
    %41 = vector.broadcast %cst_36 : f32 to vector<8x128xf32>
    %42 = arith.maximumf %40, %41 : vector<8x128xf32>
    %c5 = arith.constant 5 : index
    %c0_37 = arith.constant 0 : index
    %c0_38 = arith.constant 0 : index
    %43 = vector.load %arg3[%c5, %c0_37, %c0_38] : memref<6x128x128xf32, #tpu.memory_space<vmem>>, vector<1x128x128xf32>
    %44 = vector.shape_cast %43 : vector<1x128x128xf32> to vector<128x128xf32>
    %cst_39 = arith.constant dense<0.000000e+00> : vector<8x128xf32>
    %45 = tpu.matmul %42, %44, %cst_39 {dimension_numbers = #tpu.dot_dimension_numbers<[1], [0], [0], [1], [0, 0, 1, 1], [], []>} : vector<8x128xf32>, vector<128x128xf32>, vector<8x128xf32> -> vector<8x128xf32>
    %c4_40 = arith.constant 4 : index
    %c0_41 = arith.constant 0 : index
    %46 = vector.load %arg4[%c4_40, %c0_41] : memref<8x128xf32, #tpu.memory_space<vmem>>, vector<1x128xf32>
    %47 = vector.broadcast %46 : vector<1x128xf32> to vector<8x128xf32>
    %48 = arith.addf %45, %47 : vector<8x128xf32>
    %c0_42 = arith.constant 0 : index
    %c0_43 = arith.constant 0 : index
    %49 = vector.load %arg5[%c0_42, %c0_43] : memref<8x128xf32, #tpu.memory_space<vmem>>, vector<8x128xf32>
    tpu.vector_store %arg5[%c0_42, %c0_43], %48 {strides = array<i32>} : memref<8x128xf32, #tpu.memory_space<vmem>>, vector<8x128xf32>,
    return
  }
  func.func @transform_0(%arg0: i32) -> (i32, i32) {
    %c0_i32 = arith.constant 0 : i32
    %c0_i32_0 = arith.constant 0 : i32
    return %arg0, %c0_i32 : i32, i32
  }
  func.func @transform_1(%arg0: i32) -> (i32, i32) {
    %c0_i32 = arith.constant 0 : i32
    %c0_i32_0 = arith.constant 0 : i32
    return %arg0, %c0_i32 : i32, i32
  }
  func.func @transform_2(%arg0: i32) -> (i32, i32, i32) {
    %c0_i32 = arith.constant 0 : i32
    %c0_i32_0 = arith.constant 0 : i32
    %c0_i32_1 = arith.constant 0 : i32
    %c0_i32_2 = arith.constant 0 : i32
    return %c0_i32, %c0_i32_0, %c0_i32_1 : i32, i32, i32
  }
  func.func @transform_3(%arg0: i32) -> (i32, i32) {
    %c0_i32 = arith.constant 0 : i32
    %c0_i32_0 = arith.constant 0 : i32
    %c0_i32_1 = arith.constant 0 : i32
    return %c0_i32, %c0_i32_0 : i32, i32
  }
  func.func @transform_4(%arg0: i32) -> (i32, i32) {
    %c0_i32 = arith.constant 0 : i32
    %c0_i32_0 = arith.constant 0 : i32
    return %arg0, %c0_i32 : i32, i32
  }
}

</mosaic_0001>

<llo_original>
// kernel: tpu_custom_call.1
$region0: #{tpu_custom_call.1}
  #allocation0 [shape = 'u32[]', space=smem, size = 0x4, offset = 0x4, fixed_abs, tag = 'smem constant byte address 0x4 - core index']
  #allocation1 [shape = 'u32[144,128]{1,0:T(1,128)}', space=vmem, size = 0x12000, scoped, tag = 'internal scratch']
  #allocation2 [shape = 'f32[8,128]{1,0:T(8,128)}', space=vmem, size = 0x1000, scoped, tag = 'scratch operand']
  %s0 = inlined_call_operand.hbm [shape: f32[8,17], index: 0, kind: input, shape index: {}]
  %s1 = inlined_call_operand.hbm [shape: f32[8,8], index: 1, kind: input, shape index: {}]
  %s2 = inlined_call_operand.hbm [shape: f32[6,128,128], index: 2, kind: input, shape index: {}]
  %s3 = inlined_call_operand.vmem [shape: f32[8,128], index: 3, kind: input, shape index: {}]
  %s4 = inlined_call_operand.hbm [shape: f32[8,128], index: 4, kind: output, shape index: {}]
  %s5 = sld [smem:[#allocation0]]
  $region38: #{tpu_custom_call.1} parent=0
    _
  %s7 = ssub.s32 1, %s5
  %s8 = scalar_select 0, %s7, %s5
  $region1: #{tpu_custom_call.1} parent=0
    #allocation3 [shape = 'u8[4096]{0}', space=vmem, size = 0x1000, scoped, tag = 'input window, operand 0, single buffered']
    #allocation4 [shape = 's32[1]{0}', space=sflag, size = 0x4, scoped, tag = 'scoped memory for tpu_custom_call.1']
    #allocation5 [shape = 's32[1]{0}', space=sflag, size = 0x4, scoped, tag = 'scoped memory for tpu_custom_call.1']
    #allocation6 [shape = 'u8[4096]{0}', space=vmem, size = 0x1000, scoped, tag = 'input window, operand 1, single buffered']
    #allocation7 [shape = 's32[1]{0}', space=sflag, size = 0x4, scoped, tag = 'scoped memory for tpu_custom_call.1']
    #allocation8 [shape = 'u8[393216]{0}', space=vmem, size = 0x60000, scoped, tag = 'input window, operand 2, single buffered']
    #allocation9 [shape = 'u8[4096]{0}', space=vmem, size = 0x1000, scoped, tag = 'output window, operand 0, single buffered']
    %9 = vsyncpa [#allocation4], 0
    %10 = vsyncpa [#allocation7], 0
    %11 = vsyncpa [#allocation5], 0
    // Predicated region
    $region2: #{tpu_custom_call.1} parent=1 // pred_check
      _
    $region3: #{tpu_custom_call.1} parent=1 // pred_check_branch
      %13 = sbr.rel (0) target = $region5
    $region4: #{tpu_custom_call.1} parent=1 // pred_region
      %s15 = ssub.s32 128, 128
      %16 = vsyncadd [#allocation4], %s15
      %s18 = sshll.u32 [#allocation3], 4
      %s19 = int_to_ptr.vmem [resolvable:$true] %s18
      %21 = dma.hbm_to_vmem [thread:$0]  %s0, 128, %s19, [#allocation4]
    $region5: #{tpu_custom_call.1} parent=1 // pred_fallthru
      _
    // Predicated region
    $region6: #{tpu_custom_call.1} parent=1 // pred_check
      _
    $region7: #{tpu_custom_call.1} parent=1 // pred_check_branch
      %23 = sbr.rel (0) target = $region9
    $region8: #{tpu_custom_call.1} parent=1 // pred_region
      %s25 = ssub.s32 128, 128
      %26 = vsyncadd [#allocation7], %s25
      %s28 = sshll.u32 [#allocation6], 4
      %s29 = int_to_ptr.vmem [resolvable:$true] %s28
      %31 = dma.hbm_to_vmem [thread:$0]  %s1, 128, %s29, [#allocation7]
    $region9: #{tpu_custom_call.1} parent=1 // pred_fallthru
      _
    // Predicated region
    $region10: #{tpu_custom_call.1} parent=1 // pred_check
      _
    $region11: #{tpu_custom_call.1} parent=1 // pred_check_branch
      %33 = sbr.rel (0) target = $region13
    $region12: #{tpu_custom_call.1} parent=1 // pred_region
      %s35 = ssub.s32 12288, 12288
      %36 = vsyncadd [#allocation7], %s35
      %s37 = sshll.u32 [#allocation8], 4
      %s38 = int_to_ptr.vmem [resolvable:$true] %s37
      %43 = dma.hbm_to_vmem [thread:$0]  %s2, 12288, %s38, [#allocation7], 128, 128, 8
    $region13: #{tpu_custom_call.1} parent=1 // pred_fallthru
      _
    // Predicated region
    $region14: #{tpu_custom_call.1} parent=1 // pred_check
      _
    $region15: #{tpu_custom_call.1} parent=1 // pred_check_branch
      %45 = sbr.rel (0) target = $region17
    $region16: #{tpu_custom_call.1} parent=1 // pred_region
      _
    $region17: #{tpu_custom_call.1} parent=1 // pred_fallthru
      _
    // Predicated region
    $region18: #{tpu_custom_call.1} parent=1 // pred_check
      _
    $region19: #{tpu_custom_call.1} parent=1 // pred_check_branch
      %47 = sbr.rel (0) target = $region21
    $region20: #{tpu_custom_call.1} parent=1 // pred_region
      %48 = dma.done [#allocation4], 128
    $region21: #{tpu_custom_call.1} parent=1 // pred_fallthru
      _
    // Predicated region
    $region22: #{tpu_custom_call.1} parent=1 // pred_check
      _
    $region23: #{tpu_custom_call.1} parent=1 // pred_check_branch
      %50 = sbr.rel (0) target = $region25
    $region24: #{tpu_custom_call.1} parent=1 // pred_region
      %51 = dma.done [#allocation7], 128
    $region25: #{tpu_custom_call.1} parent=1 // pred_fallthru
      _
    // Predicated region
    $region26: #{tpu_custom_call.1} parent=1 // pred_check
      _
    $region27: #{tpu_custom_call.1} parent=1 // pred_check_branch
      %53 = sbr.rel (0) target = $region29
    $region28: #{tpu_custom_call.1} parent=1 // pred_region
      %54 = dma.done [#allocation7], 12288
    $region29: #{tpu_custom_call.1} parent=1 // pred_fallthru
      _
    %v55 = vld [vmem:[#allocation3] sm:$0xff]
    %vm56 = vcmask 138240
    %57 = vst.msk [vmem:[#allocation2] sm:$0xff] %vm56, %v55
    %v58 = vld [vmem:[#allocation6] sm:$0xff]
    %60 = vrot.lane.b32.xlu0 %v58, 17
    %v61 = vpop.permute.xlu0 %60
    %vm63 = vcmask 203912
    %64 = vst.msk [vmem:[#allocation2] sm:$0xff] %vm63, %v61
    %vm65 = vcmask 1047752
    %66 = vst.msk [vmem:[#allocation2] sm:$0xff] %vm65, 0.0
    %v67 = vld [vmem:[#allocation2] sm:$0xff]
    %v68 = vld [vmem:[#allocation8] sm:$0xff]
    %v69 = vld [vmem:[#allocation8 + $0x8] sm:$0xff]
    %v70 = vld [vmem:[#allocation8 + $0x10] sm:$0xff]
    %v71 = vld [vmem:[#allocation8 + $0x18] sm:$0xff]
    %v72 = vld [vmem:[#allocation8 + $0x20] sm:$0xff]
    %v73 = vld [vmem:[#allocation8 + $0x28] sm:$0xff]
    %v74 = vld [vmem:[#allocation8 + $0x30] sm:$0xff]
    %v75 = vld [vmem:[#allocation8 + $0x38] sm:$0xff]
    %v76 = vld [vmem:[#allocation8 + $0x40] sm:$0xff]
    %v77 = vld [vmem:[#allocation8 + $0x48] sm:$0xff]
    %v78 = vld [vmem:[#allocation8 + $0x50] sm:$0xff]
    %v79 = vld [vmem:[#allocation8 + $0x58] sm:$0xff]
    %v80 = vld [vmem:[#allocation8 + $0x60] sm:$0xff]
    %v81 = vld [vmem:[#allocation8 + $0x68] sm:$0xff]
    %v82 = vld [vmem:[#allocation8 + $0x70] sm:$0xff]
    %v83 = vld [vmem:[#allocation8 + $0x78] sm:$0xff]
    %v84 = vld [vmem:[%s3] sm:$0x1]
    %v85 = vlaneseq
    %v86 = vshrl.u32 %v85, 7
    %v87 = vsub.s32 0, %v86
    %v88 = vrot.slane %v84, %v87
    %89 = vmatprep.subr.mxu0 0.0
    %90 = vmatpush1.msra.mxu0 %v68
    %91 = vmatprep.subr.mxu0 0.0
    %92 = vmatpush1.msra.mxu0 %v69
    %93 = vmatprep.subr.mxu0 0.0
    %94 = vmatpush1.msra.mxu0 %v70
    %95 = vmatprep.subr.mxu0 0.0
    %96 = vmatpush1.msra.mxu0 %v71
    %97 = vmatprep.subr.mxu0 0.0
    %98 = vmatpush1.msra.mxu0 %v72
    %99 = vmatprep.subr.mxu0 0.0
    %100 = vmatpush1.msra.mxu0 %v73
    %101 = vmatprep.subr.mxu0 0.0
    %102 = vmatpush1.msra.mxu0 %v74
    %103 = vmatprep.subr.mxu0 0.0
    %104 = vmatpush1.msra.mxu0 %v75
    %105 = vmatprep.subr.mxu0 0.0
    %106 = vmatpush1.msra.mxu0 %v76
    %107 = vmatprep.subr.mxu0 0.0
    %108 = vmatpush1.msra.mxu0 %v77
    %109 = vmatprep.subr.mxu0 0.0
    %110 = vmatpush1.msra.mxu0 %v78
    %111 = vmatprep.subr.mxu0 0.0
    %112 = vmatpush1.msra.mxu0 %v79
    %113 = vmatprep.subr.mxu0 0.0
    %114 = vmatpush1.msra.mxu0 %v80
    %115 = vmatprep.subr.mxu0 0.0
    %116 = vmatpush1.msra.mxu0 %v81
    %117 = vmatprep.subr.mxu0 0.0
    %118 = vmatpush1.msra.mxu0 %v82
    %119 = vmatprep.subr.mxu0 0.0
    %120 = vmatpush1.msra.mxu0 %v83
    %121 = vmatprep.subr.mxu0 0.0
    %122 = vmatpush1.msra.mxu0 0.0
    %123 = vmatprep.subr.mxu0 0.0
    %124 = vmatpush1.msra.mxu0 0.0
    %125 = vmatprep.subr.mxu0 0.0
    %126 = vmatpush1.msra.mxu0 0.0
    %127 = vmatprep.subr.mxu0 0.0
    %128 = vmatpush1.msra.mxu0 0.0
    %129 = vmatprep.subr.mxu0 0.0
    %130 = vmatpush1.msra.mxu0 0.0
    %131 = vmatprep.subr.mxu0 0.0
    %132 = vmatpush1.msra.mxu0 0.0
    %133 = vmatprep.subr.mxu0 0.0
    %134 = vmatpush1.msra.mxu0 0.0
    %135 = vmatprep.subr.mxu0 0.0
    %136 = vmatpush1.msra.mxu0 0.0
    %137 = vmatprep.subr.mxu0 0.0
    %138 = vmatpush1.msra.mxu0 0.0
    %139 = vmatprep.subr.mxu0 0.0
    %140 = vmatpush1.msra.mxu0 0.0
    %141 = vmatprep.subr.mxu0 0.0
    %142 = vmatpush1.msra.mxu0 0.0
    %143 = vmatprep.subr.mxu0 0.0
    %144 = vmatpush1.msra.mxu0 0.0
    %145 = vmatprep.subr.mxu0 0.0
    %146 = vmatpush1.msra.mxu0 0.0
    %147 = vmatprep.subr.mxu0 0.0
    %148 = vmatpush1.msra.mxu0 0.0
    %149 = vmatprep.subr.mxu0 0.0
    %150 = vmatpush1.msra.mxu0 0.0
    %151 = vmatprep.subr.mxu0 0.0
    %152 = vmatpush1.msra.mxu0 0.0
    %153 = vmatprep.mubr.f32.mxu0 0.0
    %154 = vmatmul.mubr.f32.gmra.mrb[0].mxu0 %v67
    %v155 = vpop.f32.mrb[0].mxu0
    %v156 = vadd.f32 %v88, %v155
    %v157 = vpop.f32.mrb[0].mxu0
    %158 = vdwg.mxu0
    %v159 = vmax.f32 %v156, 0.0
    %s160 = scalar_lea.vmem [#allocation8], 128
    %v161 = vld [vmem:[%s160] sm:$0xff]
    %v162 = vld [vmem:[%s160 + $0x8] sm:$0xff]
    %v163 = vld [vmem:[%s160 + $0x10] sm:$0xff]
    %v164 = vld [vmem:[%s160 + $0x18] sm:$0xff]
    %v165 = vld [vmem:[%s160 + $0x20] sm:$0xff]
    %v166 = vld [vmem:[%s160 + $0x28] sm:$0xff]
    %v167 = vld [vmem:[%s160 + $0x30] sm:$0xff]
    %v168 = vld [vmem:[%s160 + $0x38] sm:$0xff]
    %v169 = vld [vmem:[%s160 + $0x40] sm:$0xff]
    %v170 = vld [vmem:[%s160 + $0x48] sm:$0xff]
    %v171 = vld [vmem:[%s160 + $0x50] sm:$0xff]
    %v172 = vld [vmem:[%s160 + $0x58] sm:$0xff]
    %v173 = vld [vmem:[%s160 + $0x60] sm:$0xff]
    %v174 = vld [vmem:[%s160 + $0x68] sm:$0xff]
    %v175 = vld [vmem:[%s160 + $0x70] sm:$0xff]
    %v176 = vld [vmem:[%s160 + $0x78] sm:$0xff]
    %v177 = vld [vmem:[%s3 + $0x1] sm:$0x1]
    %v178 = vlaneseq
    %v179 = vshrl.u32 %v178, 7
    %v180 = vsub.s32 0, %v179
    %v181 = vrot.slane %v177, %v180
    %182 = vmatprep.subr.mxu0 0.0
    %183 = vmatpush1.msra.mxu0 %v161
    %184 = vmatprep.subr.mxu0 0.0
    %185 = vmatpush1.msra.mxu0 %v162
    %186 = vmatprep.subr.mxu0 0.0
    %187 = vmatpush1.msra.mxu0 %v163
    %188 = vmatprep.subr.mxu0 0.0
    %189 = vmatpush1.msra.mxu0 %v164
    %190 = vmatprep.subr.mxu0 0.0
    %191 = vmatpush1.msra.mxu0 %v165
    %192 = vmatprep.subr.mxu0 0.0
    %193 = vmatpush1.msra.mxu0 %v166
    %194 = vmatprep.subr.mxu0 0.0
    %195 = vmatpush1.msra.mxu0 %v167
    %196 = vmatprep.subr.mxu0 0.0
    %197 = vmatpush1.msra.mxu0 %v168
    %198 = vmatprep.subr.mxu0 0.0
    %199 = vmatpush1.msra.mxu0 %v169
    %200 = vmatprep.subr.mxu0 0.0
    %201 = vmatpush1.msra.mxu0 %v170
    %202 = vmatprep.subr.mxu0 0.0
    %203 = vmatpush1.msra.mxu0 %v171
    %204 = vmatprep.subr.mxu0 0.0
    %205 = vmatpush1.msra.mxu0 %v172
    %206 = vmatprep.subr.mxu0 0.0
    %207 = vmatpush1.msra.mxu0 %v173
    %208 = vmatprep.subr.mxu0 0.0
    %209 = vmatpush1.msra.mxu0 %v174
    %210 = vmatprep.subr.mxu0 0.0
    %211 = vmatpush1.msra.mxu0 %v175
    %212 = vmatprep.subr.mxu0 0.0
    %213 = vmatpush1.msra.mxu0 %v176
    %214 = vmatprep.subr.mxu0 0.0
    %215 = vmatpush1.msra.mxu0 0.0
    %216 = vmatprep.subr.mxu0 0.0
    %217 = vmatpush1.msra.mxu0 0.0
    %218 = vmatprep.subr.mxu0 0.0
    %219 = vmatpush1.msra.mxu0 0.0
    %220 = vmatprep.subr.mxu0 0.0
    %221 = vmatpush1.msra.mxu0 0.0
    %222 = vmatprep.subr.mxu0 0.0
    %223 = vmatpush1.msra.mxu0 0.0
    %224 = vmatprep.subr.mxu0 0.0
    %225 = vmatpush1.msra.mxu0 0.0
    %226 = vmatprep.subr.mxu0 0.0
    %227 = vmatpush1.msra.mxu0 0.0
    %228 = vmatprep.subr.mxu0 0.0
    %229 = vmatpush1.msra.mxu0 0.0
    %230 = vmatprep.subr.mxu0 0.0
    %231 = vmatpush1.msra.mxu0 0.0
    %232 = vmatprep.subr.mxu0 0.0
    %233 = vmatpush1.msra.mxu0 0.0
    %234 = vmatprep.subr.mxu0 0.0
    %235 = vmatpush1.msra.mxu0 0.0
    %236 = vmatprep.subr.mxu0 0.0
    %237 = vmatpush1.msra.mxu0 0.0
    %238 = vmatprep.subr.mxu0 0.0
    %239 = vmatpush1.msra.mxu0 0.0
    %240 = vmatprep.subr.mxu0 0.0
    %241 = vmatpush1.msra.mxu0 0.0
    %242 = vmatprep.subr.mxu0 0.0
    %243 = vmatpush1.msra.mxu0 0.0
    %244 = vmatprep.subr.mxu0 0.0
    %245 = vmatpush1.msra.mxu0 0.0
    %246 = vmatprep.mubr.f32.mxu0 0.0
    %247 = vmatmul.mubr.f32.gmra.mrb[0].mxu0 %v159
    %v248 = vpop.f32.mrb[0].mxu0
    %v249 = vadd.f32 %v181, %v248
    %v250 = vpop.f32.mrb[0].mxu0
    %251 = vdwg.mxu0
    %v252 = vmax.f32 %v249, 0.0
    %s253 = scalar_lea.vmem [#allocation8], 256
    %v254 = vld [vmem:[%s253] sm:$0xff]
    %v255 = vld [vmem:[%s253 + $0x8] sm:$0xff]
    %v256 = vld [vmem:[%s253 + $0x10] sm:$0xff]
    %v257 = vld [vmem:[%s253 + $0x18] sm:$0xff]
    %v258 = vld [vmem:[%s253 + $0x20] sm:$0xff]
    %v259 = vld [vmem:[%s253 + $0x28] sm:$0xff]
    %v260 = vld [vmem:[%s253 + $0x30] sm:$0xff]
    %v261 = vld [vmem:[%s253 + $0x38] sm:$0xff]
    %v262 = vld [vmem:[%s253 + $0x40] sm:$0xff]
    %v263 = vld [vmem:[%s253 + $0x48] sm:$0xff]
    %v264 = vld [vmem:[%s253 + $0x50] sm:$0xff]
    %v265 = vld [vmem:[%s253 + $0x58] sm:$0xff]
    %v266 = vld [vmem:[%s253 + $0x60] sm:$0xff]
    %v267 = vld [vmem:[%s253 + $0x68] sm:$0xff]
    %v268 = vld [vmem:[%s253 + $0x70] sm:$0xff]
    %v269 = vld [vmem:[%s253 + $0x78] sm:$0xff]
    %v270 = vld [vmem:[%s3 + $0x2] sm:$0x1]
    %v271 = vlaneseq
    %v272 = vshrl.u32 %v271, 7
    %v273 = vsub.s32 0, %v272
    %v274 = vrot.slane %v270, %v273
    %275 = vmatprep.subr.mxu0 0.0
    %276 = vmatpush1.msra.mxu0 %v254
    %277 = vmatprep.subr.mxu0 0.0
    %278 = vmatpush1.msra.mxu0 %v255
    %279 = vmatprep.subr.mxu0 0.0
    %280 = vmatpush1.msra.mxu0 %v256
    %281 = vmatprep.subr.mxu0 0.0
    %282 = vmatpush1.msra.mxu0 %v257
    %283 = vmatprep.subr.mxu0 0.0
    %284 = vmatpush1.msra.mxu0 %v258
    %285 = vmatprep.subr.mxu0 0.0
    %286 = vmatpush1.msra.mxu0 %v259
    %287 = vmatprep.subr.mxu0 0.0
    %288 = vmatpush1.msra.mxu0 %v260
    %289 = vmatprep.subr.mxu0 0.0
    %290 = vmatpush1.msra.mxu0 %v261
    %291 = vmatprep.subr.mxu0 0.0
    %292 = vmatpush1.msra.mxu0 %v262
    %293 = vmatprep.subr.mxu0 0.0
    %294 = vmatpush1.msra.mxu0 %v263
    %295 = vmatprep.subr.mxu0 0.0
    %296 = vmatpush1.msra.mxu0 %v264
    %297 = vmatprep.subr.mxu0 0.0
    %298 = vmatpush1.msra.mxu0 %v265
    %299 = vmatprep.subr.mxu0 0.0
    %300 = vmatpush1.msra.mxu0 %v266
    %301 = vmatprep.subr.mxu0 0.0
    %302 = vmatpush1.msra.mxu0 %v267
    %303 = vmatprep.subr.mxu0 0.0
    %304 = vmatpush1.msra.mxu0 %v268
    %305 = vmatprep.subr.mxu0 0.0
    %306 = vmatpush1.msra.mxu0 %v269
    %307 = vmatprep.subr.mxu0 0.0
    %308 = vmatpush1.msra.mxu0 0.0
    %309 = vmatprep.subr.mxu0 0.0
    %310 = vmatpush1.msra.mxu0 0.0
    %311 = vmatprep.subr.mxu0 0.0
    %312 = vmatpush1.msra.mxu0 0.0
    %313 = vmatprep.subr.mxu0 0.0
    %314 = vmatpush1.msra.mxu0 0.0
    %315 = vmatprep.subr.mxu0 0.0
    %316 = vmatpush1.msra.mxu0 0.0
    %317 = vmatprep.subr.mxu0 0.0
    %318 = vmatpush1.msra.mxu0 0.0
    %319 = vmatprep.subr.mxu0 0.0
    %320 = vmatpush1.msra.mxu0 0.0
    %321 = vmatprep.subr.mxu0 0.0
    %322 = vmatpush1.msra.mxu0 0.0
    %323 = vmatprep.subr.mxu0 0.0
    %324 = vmatpush1.msra.mxu0 0.0
    %325 = vmatprep.subr.mxu0 0.0
    %326 = vmatpush1.msra.mxu0 0.0
    %327 = vmatprep.subr.mxu0 0.0
    %328 = vmatpush1.msra.mxu0 0.0
    %329 = vmatprep.subr.mxu0 0.0
    %330 = vmatpush1.msra.mxu0 0.0
    %331 = vmatprep.subr.mxu0 0.0
    %332 = vmatpush1.msra.mxu0 0.0
    %333 = vmatprep.subr.mxu0 0.0
    %334 = vmatpush1.msra.mxu0 0.0
    %335 = vmatprep.subr.mxu0 0.0
    %336 = vmatpush1.msra.mxu0 0.0
    %337 = vmatprep.subr.mxu0 0.0
    %338 = vmatpush1.msra.mxu0 0.0
    %339 = vmatprep.mubr.f32.mxu0 0.0
    %340 = vmatmul.mubr.f32.gmra.mrb[0].mxu0 %v252
    %v341 = vpop.f32.mrb[0].mxu0
    %v342 = vadd.f32 %v274, %v341
    %v343 = vpop.f32.mrb[0].mxu0
    %344 = vdwg.mxu0
    %v345 = vmax.f32 %v342, 0.0
    %s346 = scalar_lea.vmem [#allocation8], 384
    %v347 = vld [vmem:[%s346] sm:$0xff]
    %v348 = vld [vmem:[%s346 + $0x8] sm:$0xff]
    %v349 = vld [vmem:[%s346 + $0x10] sm:$0xff]
    %v350 = vld [vmem:[%s346 + $0x18] sm:$0xff]
    %v351 = vld [vmem:[%s346 + $0x20] sm:$0xff]
    %v352 = vld [vmem:[%s346 + $0x28] sm:$0xff]
    %v353 = vld [vmem:[%s346 + $0x30] sm:$0xff]
    %v354 = vld [vmem:[%s346 + $0x38] sm:$0xff]
    %v355 = vld [vmem:[%s346 + $0x40] sm:$0xff]
    %v356 = vld [vmem:[%s346 + $0x48] sm:$0xff]
    %v357 = vld [vmem:[%s346 + $0x50] sm:$0xff]
    %v358 = vld [vmem:[%s346 + $0x58] sm:$0xff]
    %v359 = vld [vmem:[%s346 + $0x60] sm:$0xff]
    %v360 = vld [vmem:[%s346 + $0x68] sm:$0xff]
    %v361 = vld [vmem:[%s346 + $0x70] sm:$0xff]
    %v362 = vld [vmem:[%s346 + $0x78] sm:$0xff]
    %s363 = scalar_lea.vmem [#allocation8], 512
    %v364 = vld [vmem:[%s363] sm:$0xff]
    %v365 = vld [vmem:[%s363 + $0x8] sm:$0xff]
    %v366 = vld [vmem:[%s363 + $0x10] sm:$0xff]
    %v367 = vld [vmem:[%s363 + $0x18] sm:$0xff]
    %v368 = vld [vmem:[%s363 + $0x20] sm:$0xff]
    %v369 = vld [vmem:[%s363 + $0x28] sm:$0xff]
    %v370 = vld [vmem:[%s363 + $0x30] sm:$0xff]
    %v371 = vld [vmem:[%s363 + $0x38] sm:$0xff]
    %v372 = vld [vmem:[%s363 + $0x40] sm:$0xff]
    %v373 = vld [vmem:[%s363 + $0x48] sm:$0xff]
    %v374 = vld [vmem:[%s363 + $0x50] sm:$0xff]
    %v375 = vld [vmem:[%s363 + $0x58] sm:$0xff]
    %v376 = vld [vmem:[%s363 + $0x60] sm:$0xff]
    %v377 = vld [vmem:[%s363 + $0x68] sm:$0xff]
    %v378 = vld [vmem:[%s363 + $0x70] sm:$0xff]
    %v379 = vld [vmem:[%s363 + $0x78] sm:$0xff]
    %380 = vmatprep.subr.mxu0 0.0
    %381 = vmatpush1.msra.mxu0 %v364
    %382 = vmatprep.subr.mxu0 0.0
    %383 = vmatpush1.msra.mxu0 %v365
    %384 = vmatprep.subr.mxu0 0.0
    %385 = vmatpush1.msra.mxu0 %v366
    %386 = vmatprep.subr.mxu0 0.0
    %387 = vmatpush1.msra.mxu0 %v367
    %388 = vmatprep.subr.mxu0 0.0
    %389 = vmatpush1.msra.mxu0 %v368
    %390 = vmatprep.subr.mxu0 0.0
    %391 = vmatpush1.msra.mxu0 %v369
    %392 = vmatprep.subr.mxu0 0.0
    %393 = vmatpush1.msra.mxu0 %v370
    %394 = vmatprep.subr.mxu0 0.0
    %395 = vmatpush1.msra.mxu0 %v371
    %396 = vmatprep.subr.mxu0 0.0
    %397 = vmatpush1.msra.mxu0 %v372
    %398 = vmatprep.subr.mxu0 0.0
    %399 = vmatpush1.msra.mxu0 %v373
    %400 = vmatprep.subr.mxu0 0.0
    %401 = vmatpush1.msra.mxu0 %v374
    %402 = vmatprep.subr.mxu0 0.0
    %403 = vmatpush1.msra.mxu0 %v375
    %404 = vmatprep.subr.mxu0 0.0
    %405 = vmatpush1.msra.mxu0 %v376
    %406 = vmatprep.subr.mxu0 0.0
    %407 = vmatpush1.msra.mxu0 %v377
    %408 = vmatprep.subr.mxu0 0.0
    %409 = vmatpush1.msra.mxu0 %v378
    %410 = vmatprep.subr.mxu0 0.0
    %411 = vmatpush1.msra.mxu0 %v379
    %412 = vmatprep.subr.mxu0 0.0
    %413 = vmatpush1.msra.mxu0 0.0
    %414 = vmatprep.subr.mxu0 0.0
    %415 = vmatpush1.msra.mxu0 0.0
    %416 = vmatprep.subr.mxu0 0.0
    %417 = vmatpush1.msra.mxu0 0.0
    %418 = vmatprep.subr.mxu0 0.0
    %419 = vmatpush1.msra.mxu0 0.0
    %420 = vmatprep.subr.mxu0 0.0
    %421 = vmatpush1.msra.mxu0 0.0
    %422 = vmatprep.subr.mxu0 0.0
    %423 = vmatpush1.msra.mxu0 0.0
    %424 = vmatprep.subr.mxu0 0.0
    %425 = vmatpush1.msra.mxu0 0.0
    %426 = vmatprep.subr.mxu0 0.0
    %427 = vmatpush1.msra.mxu0 0.0
    %428 = vmatprep.subr.mxu0 0.0
    %429 = vmatpush1.msra.mxu0 0.0
    %430 = vmatprep.subr.mxu0 0.0
    %431 = vmatpush1.msra.mxu0 0.0
    %432 = vmatprep.subr.mxu0 0.0
    %433 = vmatpush1.msra.mxu0 0.0
    %434 = vmatprep.subr.mxu0 0.0
    %435 = vmatpush1.msra.mxu0 0.0
    %436 = vmatprep.subr.mxu0 0.0
    %437 = vmatpush1.msra.mxu0 0.0
    %438 = vmatprep.subr.mxu0 0.0
    %439 = vmatpush1.msra.mxu0 0.0
    %440 = vmatprep.subr.mxu0 0.0
    %441 = vmatpush1.msra.mxu0 0.0
    %442 = vmatprep.subr.mxu0 0.0
    %443 = vmatpush1.msra.mxu0 0.0
    %444 = vmatprep.mubr.f32.mxu0 0.0
    %445 = vmatmul.mubr.f32.gmra.mrb[0].mxu0 %v67
    %v446 = vpop.f32.mrb[0].mxu0
    %v447 = vadd.f32 0.0, %v446
    %v448 = vpop.f32.mrb[0].mxu0
    %449 = vdwg.mxu0
    %450 = vmatprep.subr.mxu0 0.0
    %451 = vmatpush1.msra.mxu0 %v347
    %452 = vmatprep.subr.mxu0 0.0
    %453 = vmatpush1.msra.mxu0 %v348
    %454 = vmatprep.subr.mxu0 0.0
    %455 = vmatpush1.msra.mxu0 %v349
    %456 = vmatprep.subr.mxu0 0.0
    %457 = vmatpush1.msra.mxu0 %v350
    %458 = vmatprep.subr.mxu0 0.0
    %459 = vmatpush1.msra.mxu0 %v351
    %460 = vmatprep.subr.mxu0 0.0
    %461 = vmatpush1.msra.mxu0 %v352
    %462 = vmatprep.subr.mxu0 0.0
    %463 = vmatpush1.msra.mxu0 %v353
    %464 = vmatprep.subr.mxu0 0.0
    %465 = vmatpush1.msra.mxu0 %v354
    %466 = vmatprep.subr.mxu0 0.0
    %467 = vmatpush1.msra.mxu0 %v355
    %468 = vmatprep.subr.mxu0 0.0
    %469 = vmatpush1.msra.mxu0 %v356
    %470 = vmatprep.subr.mxu0 0.0
    %471 = vmatpush1.msra.mxu0 %v357
    %472 = vmatprep.subr.mxu0 0.0
    %473 = vmatpush1.msra.mxu0 %v358
    %474 = vmatprep.subr.mxu0 0.0
    %475 = vmatpush1.msra.mxu0 %v359
    %476 = vmatprep.subr.mxu0 0.0
    %477 = vmatpush1.msra.mxu0 %v360
    %478 = vmatprep.subr.mxu0 0.0
    %479 = vmatpush1.msra.mxu0 %v361
    %480 = vmatprep.subr.mxu0 0.0
    %481 = vmatpush1.msra.mxu0 %v362
    %482 = vmatprep.subr.mxu0 0.0
    %483 = vmatpush1.msra.mxu0 0.0
    %484 = vmatprep.subr.mxu0 0.0
    %485 = vmatpush1.msra.mxu0 0.0
    %486 = vmatprep.subr.mxu0 0.0
    %487 = vmatpush1.msra.mxu0 0.0
    %488 = vmatprep.subr.mxu0 0.0
    %489 = vmatpush1.msra.mxu0 0.0
    %490 = vmatprep.subr.mxu0 0.0
    %491 = vmatpush1.msra.mxu0 0.0
    %492 = vmatprep.subr.mxu0 0.0
    %493 = vmatpush1.msra.mxu0 0.0
    %494 = vmatprep.subr.mxu0 0.0
    %495 = vmatpush1.msra.mxu0 0.0
    %496 = vmatprep.subr.mxu0 0.0
    %497 = vmatpush1.msra.mxu0 0.0
    %498 = vmatprep.subr.mxu0 0.0
    %499 = vmatpush1.msra.mxu0 0.0
    %500 = vmatprep.subr.mxu0 0.0
    %501 = vmatpush1.msra.mxu0 0.0
    %502 = vmatprep.subr.mxu0 0.0
    %503 = vmatpush1.msra.mxu0 0.0
    %504 = vmatprep.subr.mxu0 0.0
    %505 = vmatpush1.msra.mxu0 0.0
    %506 = vmatprep.subr.mxu0 0.0
    %507 = vmatpush1.msra.mxu0 0.0
    %508 = vmatprep.subr.mxu0 0.0
    %509 = vmatpush1.msra.mxu0 0.0
    %510 = vmatprep.subr.mxu0 0.0
    %511 = vmatpush1.msra.mxu0 0.0
    %512 = vmatprep.subr.mxu0 0.0
    %513 = vmatpush1.msra.mxu0 0.0
    %514 = vmatprep.mubr.f32.mxu0 0.0
    %515 = vmatmul.mubr.f32.gmra.mrb[0].mxu0 %v345
    %v516 = vpop.f32.mrb[0].mxu0
    %v517 = vadd.f32 %v447, %v516
    %v518 = vpop.f32.mrb[0].mxu0
    %519 = vdwg.mxu0
    %v520 = vld [vmem:[%s3 + $0x3] sm:$0x1]
    %v521 = vlaneseq
    %v522 = vshrl.u32 %v521, 7
    %v523 = vsub.s32 0, %v522
    %v524 = vrot.slane %v520, %v523
    %v525 = vadd.f32 %v517, %v524
    %v526 = vmax.f32 %v525, 0.0
    %s527 = scalar_lea.vmem [#allocation8], 640
    %v528 = vld [vmem:[%s527] sm:$0xff]
    %v529 = vld [vmem:[%s527 + $0x8] sm:$0xff]
    %v530 = vld [vmem:[%s527 + $0x10] sm:$0xff]
    %v531 = vld [vmem:[%s527 + $0x18] sm:$0xff]
    %v532 = vld [vmem:[%s527 + $0x20] sm:$0xff]
    %v533 = vld [vmem:[%s527 + $0x28] sm:$0xff]
    %v534 = vld [vmem:[%s527 + $0x30] sm:$0xff]
    %v535 = vld [vmem:[%s527 + $0x38] sm:$0xff]
    %v536 = vld [vmem:[%s527 + $0x40] sm:$0xff]
    %v537 = vld [vmem:[%s527 + $0x48] sm:$0xff]
    %v538 = vld [vmem:[%s527 + $0x50] sm:$0xff]
    %v539 = vld [vmem:[%s527 + $0x58] sm:$0xff]
    %v540 = vld [vmem:[%s527 + $0x60] sm:$0xff]
    %v541 = vld [vmem:[%s527 + $0x68] sm:$0xff]
    %v542 = vld [vmem:[%s527 + $0x70] sm:$0xff]
    %v543 = vld [vmem:[%s527 + $0x78] sm:$0xff]
    %v544 = vld [vmem:[%s3 + $0x4] sm:$0x1]
    %v545 = vlaneseq
    %v546 = vshrl.u32 %v545, 7
    %v547 = vsub.s32 0, %v546
    %v548 = vrot.slane %v544, %v547
    %549 = vmatprep.subr.mxu0 0.0
    %550 = vmatpush1.msra.mxu0 %v528
    %551 = vmatprep.subr.mxu0 0.0
    %552 = vmatpush1.msra.mxu0 %v529
    %553 = vmatprep.subr.mxu0 0.0
    %554 = vmatpush1.msra.mxu0 %v530
    %555 = vmatprep.subr.mxu0 0.0
    %556 = vmatpush1.msra.mxu0 %v531
    %557 = vmatprep.subr.mxu0 0.0
    %558 = vmatpush1.msra.mxu0 %v532
    %559 = vmatprep.subr.mxu0 0.0
    %560 = vmatpush1.msra.mxu0 %v533
    %561 = vmatprep.subr.mxu0 0.0
    %562 = vmatpush1.msra.mxu0 %v534
    %563 = vmatprep.subr.mxu0 0.0
    %564 = vmatpush1.msra.mxu0 %v535
    %565 = vmatprep.subr.mxu0 0.0
    %566 = vmatpush1.msra.mxu0 %v536
    %567 = vmatprep.subr.mxu0 0.0
    %568 = vmatpush1.msra.mxu0 %v537
    %569 = vmatprep.subr.mxu0 0.0
    %570 = vmatpush1.msra.mxu0 %v538
    %571 = vmatprep.subr.mxu0 0.0
    %572 = vmatpush1.msra.mxu0 %v539
    %573 = vmatprep.subr.mxu0 0.0
    %574 = vmatpush1.msra.mxu0 %v540
    %575 = vmatprep.subr.mxu0 0.0
    %576 = vmatpush1.msra.mxu0 %v541
    %577 = vmatprep.subr.mxu0 0.0
    %578 = vmatpush1.msra.mxu0 %v542
    %579 = vmatprep.subr.mxu0 0.0
    %580 = vmatpush1.msra.mxu0 %v543
    %581 = vmatprep.subr.mxu0 0.0
    %582 = vmatpush1.msra.mxu0 0.0
    %583 = vmatprep.subr.mxu0 0.0
    %584 = vmatpush1.msra.mxu0 0.0
    %585 = vmatprep.subr.mxu0 0.0
    %586 = vmatpush1.msra.mxu0 0.0
    %587 = vmatprep.subr.mxu0 0.0
    %588 = vmatpush1.msra.mxu0 0.0
    %589 = vmatprep.subr.mxu0 0.0
    %590 = vmatpush1.msra.mxu0 0.0
    %591 = vmatprep.subr.mxu0 0.0
    %592 = vmatpush1.msra.mxu0 0.0
    %593 = vmatprep.subr.mxu0 0.0
    %594 = vmatpush1.msra.mxu0 0.0
    %595 = vmatprep.subr.mxu0 0.0
    %596 = vmatpush1.msra.mxu0 0.0
    %597 = vmatprep.subr.mxu0 0.0
    %598 = vmatpush1.msra.mxu0 0.0
    %599 = vmatprep.subr.mxu0 0.0
    %600 = vmatpush1.msra.mxu0 0.0
    %601 = vmatprep.subr.mxu0 0.0
    %602 = vmatpush1.msra.mxu0 0.0
    %603 = vmatprep.subr.mxu0 0.0
    %604 = vmatpush1.msra.mxu0 0.0
    %605 = vmatprep.subr.mxu0 0.0
    %606 = vmatpush1.msra.mxu0 0.0
    %607 = vmatprep.subr.mxu0 0.0
    %608 = vmatpush1.msra.mxu0 0.0
    %609 = vmatprep.subr.mxu0 0.0
    %610 = vmatpush1.msra.mxu0 0.0
    %611 = vmatprep.subr.mxu0 0.0
    %612 = vmatpush1.msra.mxu0 0.0
    %613 = vmatprep.mubr.f32.mxu0 0.0
    %614 = vmatmul.mubr.f32.gmra.mrb[0].mxu0 %v526
    %v615 = vpop.f32.mrb[0].mxu0
    %v616 = vadd.f32 %v548, %v615
    %v617 = vpop.f32.mrb[0].mxu0
    %618 = vdwg.mxu0
    %619 = vst [vmem:[#allocation9] sm:$0xff] %v616
    // Predicated region
    $region30: #{tpu_custom_call.1} parent=1 // pred_check
      _
    $region31: #{tpu_custom_call.1} parent=1 // pred_check_branch
      %621 = sbr.rel (0) target = $region33
    $region32: #{tpu_custom_call.1} parent=1 // pred_region
      %s623 = ssub.s32 128, 128
      %624 = vsyncadd [#allocation5], %s623
      %s626 = sshll.u32 [#allocation9], 4
      %s627 = int_to_ptr.vmem [resolvable:$true] %s626
      %629 = dma.vmem_to_hbm [thread:$0]  %s627, 128, %s4, [#allocation5]
    $region33: #{tpu_custom_call.1} parent=1 // pred_fallthru
      _
    // Predicated region
    $region34: #{tpu_custom_call.1} parent=1 // pred_check
      _
    $region35: #{tpu_custom_call.1} parent=1 // pred_check_branch
      %631 = sbr.rel (0) target = $region37
    $region36: #{tpu_custom_call.1} parent=1 // pred_region
      %632 = dma.done [#allocation5], 128
    $region37: #{tpu_custom_call.1} parent=1 // pred_fallthru
      _
    %633 = vsyncpa [#allocation4], 1
    %634 = vsyncpa [#allocation7], 1
    %635 = vsyncpa [#allocation5], 1

</llo_original>
